<compile_context>
chip_gen: v7x
topology: tpu7x:2x2x1
jax: 0.10.0
libtpu: 0.0.40
codegen_flags: <defaults>
</compile_context>

<pallas_src>
import jax
import jax.numpy as jnp
from jax.experimental import pallas as pl
from jax.experimental.pallas import tpu as pltpu

LANE = 128


def dqn_kernel(x_ref, w1_ref, b1_ref, w2_ref, b2_ref, o_ref):
    # x_ref : (TM, input_size)        f32  (cast to bf16 in-kernel)
    # w1_ref: (input_size, hidden)    bf16 (resident across the batch grid)
    # b1_ref: (1, hidden)             f32
    # w2_ref: (hidden, n_pad)         bf16 (num_classes zero-padded to 128 lanes)
    # b2_ref: (1, n_pad)              f32
    # o_ref : (TM, n_pad)             f32  (lane-dense output slab)
    x = x_ref[...].astype(jnp.bfloat16)        # in-kernel cast: VPU work hidden under MXU
    h = jnp.dot(x, w1_ref[...], preferred_element_type=jnp.float32)
    h = jnp.maximum(h + b1_ref[...], 0.0)      # bias + ReLU in f32 (v5e-friendly)
    h = h.astype(w2_ref.dtype)                 # bf16 LHS -> fast MXU path for matmul 2
    o = jnp.dot(h, w2_ref[...], preferred_element_type=jnp.float32)
    o_ref[...] = (o + b2_ref[...]).astype(o_ref.dtype)


def prepare_params(w1, b1, w2, b2):
    """One-time packing: bf16 weights, (1, N) f32 bias rows, num_classes padded
    to a lane-dense multiple of 128 for the output slab."""
    input_size, hidden = w1.shape
    num_classes = w2.shape[1]
    n_pad = max(LANE, pl.cdiv(num_classes, LANE) * LANE)
    w1b = w1.astype(jnp.bfloat16)
    w2b = jnp.zeros((hidden, n_pad), jnp.bfloat16).at[:, :num_classes].set(
        w2.astype(jnp.bfloat16))
    b1r = b1.reshape(1, hidden).astype(jnp.float32)
    b2r = jnp.zeros((1, n_pad), jnp.float32).at[:, :num_classes].set(
        b2.reshape(1, num_classes).astype(jnp.float32))
    return dict(w1=w1b, b1=b1r, w2=w2b, b2=b2r, num_classes=num_classes)


def _num_tensorcores():
    """Best-effort detection of per-chip TensorCore count (v7-class has 2)."""
    try:
        kind = jax.devices()[0].device_kind.lower()
    except Exception:
        return 1
    return 2 if "v7" in kind else 1


def _auto_tm(b):
    """Pick the batch tile:
      * 1-TC chips (v5e/v6e): one full-batch tile -> no pad, no extra grid steps.
      * 2-TC chips (v7-class): two tiles so dimension_semantics=('parallel',)
        actually shards across both TensorCores.
      * Very large batches: fixed 256-row tiles."""
    cap = 512
    if b <= cap:
        if _num_tensorcores() == 2 and b % 16 == 0 and b >= 16:
            return b // 2          # two tiles, each a multiple of 8 rows
        return b                   # single tile == full array dim (no (8,) constraint)
    return 256


def dqn_forward_batched(x, params, *, tm=None, out_dtype=jnp.float32):
    """x: (B, input_size) f32.

    Returns the lane-dense padded slab (B_pad, n_pad) in `out_dtype` so no
    extra HBM pass is spent shrinking it; slice [:B, :num_classes] lazily
    downstream if a tight view is needed."""
    w1, b1, w2, b2 = params["w1"], params["b1"], params["w2"], params["b2"]
    input_size, hidden = w1.shape
    n_pad = w2.shape[1]
    assert x.ndim == 2 and x.shape[1] == input_size, (
        f"expected (B, {input_size}), got {x.shape}")

    b = x.shape[0]
    if tm is None:
        tm = _auto_tm(b)
    n_tiles = pl.cdiv(b, tm)
    b_pad = n_tiles * tm
    # With auto tm the pad is a no-op for any B <= 512; padded rows only cost
    # wasted MXU work (their garbage outputs are outside the [:B] view).
    xp = x if b_pad == b else jnp.pad(x, ((0, b_pad - b), (0, 0)))

    out_itemsize = jnp.dtype(out_dtype).itemsize
    flops = 2 * b_pad * (input_size * hidden + hidden * n_pad)
    bytes_accessed = (xp.size * 4 + w1.size * 2 + w2.size * 2
                      + b1.size * 4 + b2.size * 4 + b_pad * n_pad * out_itemsize)

    out = pl.pallas_call(
        dqn_kernel,
        out_shape=jax.ShapeDtypeStruct((b_pad, n_pad), out_dtype),
        grid=(n_tiles,),
        in_specs=[
            pl.BlockSpec((tm, input_size), lambda i: (i, 0)),       # x tile (f32)
            pl.BlockSpec((input_size, hidden), lambda i: (0, 0)),   # w1 resident
            pl.BlockSpec((1, hidden), lambda i: (0, 0)),            # b1 resident
            pl.BlockSpec((hidden, n_pad), lambda i: (0, 0)),        # w2 resident
            pl.BlockSpec((1, n_pad), lambda i: (0, 0)),             # b2 resident
        ],
        out_specs=pl.BlockSpec((tm, n_pad), lambda i: (i, 0)),
        compiler_params=pltpu.CompilerParams(
            dimension_semantics=("parallel",)),   # 2-TC chips: batch tiles split across cores
        cost_estimate=pl.CostEstimate(
            flops=flops, transcendentals=0, bytes_accessed=bytes_accessed),
    )(xp, w1, b1, w2, b2)

    return out


def dqn_forward(x, params):
    """Module-faithful forward: relu(fc1(x.flatten())) -> fc2, returns (num_classes,).

    Single-sample latency is dominated by launch overhead regardless of tiling;
    the batched kernel at tm=1 (full batch of one) is used for uniformity."""
    input_size = params["w1"].shape[0]
    num_classes = params["num_classes"]
    assert x.size == input_size, f"x has {x.size} elements, expected {input_size}"
    out = dqn_forward_batched(x.reshape(1, input_size).astype(jnp.float32), params)
    return out[0, :num_classes]


def init_params(key, input_size, hidden_size, num_classes):
    """Deterministic init mimicking nn.Linear's uniform(-1/sqrt(fan_in), ...)."""
    k1, k2, k3, k4 = jax.random.split(key, 4)
    lim1 = 1.0 / jnp.sqrt(jnp.float32(input_size))
    lim2 = 1.0 / jnp.sqrt(jnp.float32(hidden_size))
    # stored as (in, out) for the kernel (transpose of torch's (out, in))
    w1 = jax.random.uniform(k1, (input_size, hidden_size), jnp.float32, -lim1, lim1)
    b1 = jax.random.uniform(k2, (hidden_size,), jnp.float32, -lim1, lim1)
    w2 = jax.random.uniform(k3, (hidden_size, num_classes), jnp.float32, -lim2, lim2)
    b2 = jax.random.uniform(k4, (num_classes,), jnp.float32, -lim2, lim2)
    return w1, b1, w2, b2


if __name__ == "__main__":
    input_size, hidden_size, num_classes = 256, 128, 64
    batch = 256

    key = jax.random.PRNGKey(0)
    kx, kb, kp = jax.random.split(key, 3)
    x_single = jax.random.normal(kx, (16, 16), jnp.float32)          # flattens to 256
    x_batch = jax.random.normal(kb, (batch, input_size), jnp.float32)

    w1, b1, w2, b2 = init_params(kp, input_size, hidden_size, num_classes)
    params = prepare_params(w1, b1, w2, b2)

    # Pure-JAX reference using the same bf16-quantized weights / activations.
    # NOTE: x and the hidden activation are bf16-quantized (vs torch f32), so
    # comparisons against true torch outputs should expect ~1e-2 differences.
    def ref_forward(xf):
        xq = xf.astype(jnp.bfloat16).astype(jnp.float32)
        w1f = params["w1"].astype(jnp.float32)
        w2f = params["w2"][:, :num_classes].astype(jnp.float32)
        h = jnp.maximum(xq @ w1f + params["b1"], 0.0)
        h = h.astype(jnp.bfloat16).astype(jnp.float32)
        return h @ w2f + params["b2"][:, :num_classes]

    # Batched path (main perf path): padded lane-dense slab out, sliced only here
    # for the correctness comparison.
    out_b = jax.block_until_ready(dqn_forward_batched(x_batch, params))
    ref_b = ref_forward(x_batch)
    assert out_b.shape[0] >= batch and out_b.shape[1] == 128
    assert jnp.allclose(out_b[:batch, :num_classes], ref_b, atol=1e-2, rtol=1e-2)

    # Single-sample path matching the PyTorch module's x.flatten() semantics.
    out_s = jax.block_until_ready(dqn_forward(x_single, params))
    ref_s = ref_forward(x_single.reshape(1, input_size))[0]
    assert out_s.shape == (num_classes,)
    assert jnp.allclose(out_s, ref_s, atol=1e-2, rtol=1e-2)

    print("KERNEL_OK")
</pallas_src>

<mosaic_0001>
module attributes {stable_mosaic.version = 11 : i64} {
  func.func @dqn_kernel(%arg0: i32, %arg1: memref<256x256xf32, #tpu.memory_space<vmem>>, %arg2: memref<256x128xbf16, #tpu.memory_space<vmem>>, %arg3: memref<1x128xf32, #tpu.memory_space<vmem>>, %arg4: memref<128x128xbf16, #tpu.memory_space<vmem>>, %arg5: memref<1x128xf32, #tpu.memory_space<vmem>>, %arg6: memref<256x128xf32, #tpu.memory_space<vmem>>) attributes {dimension_semantics = [#tpu.dimension_semantics<parallel>], iteration_bounds = array<i64: 1>, scalar_prefetch = 0 : i64, scratch_operands = 0 : i64, tpu.core_type = #tpu.core_type<tc>, window_params = [{transform_indices = @transform_0, window_bounds = array<i64: 256, 256>}, {pipeline_mode = #tpu.pipeline_mode<synchronous>, transform_indices = @transform_1, window_bounds = array<i64: 256, 128>}, {pipeline_mode = #tpu.pipeline_mode<synchronous>, transform_indices = @transform_2, window_bounds = array<i64: 1, 128>}, {pipeline_mode = #tpu.pipeline_mode<synchronous>, transform_indices = @transform_3, window_bounds = array<i64: 128, 128>}, {pipeline_mode = #tpu.pipeline_mode<synchronous>, transform_indices = @transform_4, window_bounds = array<i64: 1, 128>}, {transform_indices = @transform_5, window_bounds = array<i64: 256, 128>}]} {
    %c0 = arith.constant 0 : index
    %c0_0 = arith.constant 0 : index
    %0 = vector.load %arg1[%c0, %c0_0] : memref<256x256xf32, #tpu.memory_space<vmem>>, vector<256x256xf32>
    %1 = arith.truncf %0 : vector<256x256xf32> to vector<256x256xbf16>
    %c0_1 = arith.constant 0 : index
    %c0_2 = arith.constant 0 : index
    %2 = vector.load %arg2[%c0_1, %c0_2] : memref<256x128xbf16, #tpu.memory_space<vmem>>, vector<256x128xbf16>
    %cst = arith.constant dense<0.000000e+00> : vector<256x128xf32>
    %3 = tpu.matmul %1, %2, %cst {dimension_numbers = #tpu.dot_dimension_numbers<[1], [0], [0], [1], [0, 0, 1, 1], [], []>} : vector<256x256xbf16>, vector<256x128xbf16>, vector<256x128xf32> -> vector<256x128xf32>
    %c0_3 = arith.constant 0 : index
    %c0_4 = arith.constant 0 : index
    %4 = vector.load %arg3[%c0_3, %c0_4] : memref<1x128xf32, #tpu.memory_space<vmem>>, vector<1x128xf32>
    %5 = vector.broadcast %4 : vector<1x128xf32> to vector<256x128xf32>
    %6 = arith.addf %3, %5 : vector<256x128xf32>
    %cst_5 = arith.constant 0.000000e+00 : f32
    %7 = vector.broadcast %cst_5 : f32 to vector<256x128xf32>
    %8 = arith.maximumf %6, %7 : vector<256x128xf32>
    %9 = arith.truncf %8 : vector<256x128xf32> to vector<256x128xbf16>
    %c0_6 = arith.constant 0 : index
    %c0_7 = arith.constant 0 : index
    %10 = vector.load %arg4[%c0_6, %c0_7] : memref<128x128xbf16, #tpu.memory_space<vmem>>, vector<128x128xbf16>
    %cst_8 = arith.constant dense<0.000000e+00> : vector<256x128xf32>
    %11 = tpu.matmul %9, %10, %cst_8 {dimension_numbers = #tpu.dot_dimension_numbers<[1], [0], [0], [1], [0, 0, 1, 1], [], []>} : vector<256x128xbf16>, vector<128x128xbf16>, vector<256x128xf32> -> vector<256x128xf32>
    %c0_9 = arith.constant 0 : index
    %c0_10 = arith.constant 0 : index
    %12 = vector.load %arg5[%c0_9, %c0_10] : memref<1x128xf32, #tpu.memory_space<vmem>>, vector<1x128xf32>
    %13 = vector.broadcast %12 : vector<1x128xf32> to vector<256x128xf32>
    %14 = arith.addf %11, %13 : vector<256x128xf32>
    %c0_11 = arith.constant 0 : index
    %c0_12 = arith.constant 0 : index
    %15 = vector.load %arg6[%c0_11, %c0_12] : memref<256x128xf32, #tpu.memory_space<vmem>>, vector<256x128xf32>
    tpu.vector_store %arg6[%c0_11, %c0_12], %14 {strides = array<i32>} : memref<256x128xf32, #tpu.memory_space<vmem>>, vector<256x128xf32>,
    return
  }
  func.func @transform_0(%arg0: i32) -> (i32, i32) {
    %c0_i32 = arith.constant 0 : i32
    %c0_i32_0 = arith.constant 0 : i32
    return %arg0, %c0_i32 : i32, i32
  }
  func.func @transform_1(%arg0: i32) -> (i32, i32) {
    %c0_i32 = arith.constant 0 : i32
    %c0_i32_0 = arith.constant 0 : i32
    %c0_i32_1 = arith.constant 0 : i32
    return %c0_i32, %c0_i32_0 : i32, i32
  }
  func.func @transform_2(%arg0: i32) -> (i32, i32) {
    %c0_i32 = arith.constant 0 : i32
    %c0_i32_0 = arith.constant 0 : i32
    %c0_i32_1 = arith.constant 0 : i32
    return %c0_i32, %c0_i32_0 : i32, i32
  }
  func.func @transform_3(%arg0: i32) -> (i32, i32) {
    %c0_i32 = arith.constant 0 : i32
    %c0_i32_0 = arith.constant 0 : i32
    %c0_i32_1 = arith.constant 0 : i32
    return %c0_i32, %c0_i32_0 : i32, i32
  }
  func.func @transform_4(%arg0: i32) -> (i32, i32) {
    %c0_i32 = arith.constant 0 : i32
    %c0_i32_0 = arith.constant 0 : i32
    %c0_i32_1 = arith.constant 0 : i32
    return %c0_i32, %c0_i32_0 : i32, i32
  }
  func.func @transform_5(%arg0: i32) -> (i32, i32) {
    %c0_i32 = arith.constant 0 : i32
    %c0_i32_0 = arith.constant 0 : i32
    return %arg0, %c0_i32 : i32, i32
  }
}

</mosaic_0001>

<llo_original>
// kernel: tpu_custom_call.1
$region0: #{tpu_custom_call.1}
  #allocation0 [shape = 'u32[]', space=smem, size = 0x4, offset = 0x4, fixed_abs, tag = 'smem constant byte address 0x4 - core index']
  #allocation1 [shape = 'u32[144,128]{1,0:T(1,128)}', space=vmem, size = 0x12000, scoped, tag = 'internal scratch']
  %s0 = inlined_call_operand.hbm [shape: f32[256,256], index: 0, kind: input, shape index: {}]
  %s1 = inlined_call_operand.hbm [shape: bf16[256,128], index: 1, kind: input, shape index: {}]
  %s2 = inlined_call_operand.vmem [shape: f32[1,128], index: 2, kind: input, shape index: {}]
  %s3 = inlined_call_operand.hbm [shape: bf16[128,128], index: 3, kind: input, shape index: {}]
  %s4 = inlined_call_operand.vmem [shape: f32[1,128], index: 4, kind: input, shape index: {}]
  %s5 = inlined_call_operand.hbm [shape: f32[256,128], index: 5, kind: output, shape index: {}]
  %s6 = sld [smem:[#allocation0]]
  $region42: #{tpu_custom_call.1} parent=0
    _
  %s8 = ssub.s32 1, %s6
  %s9 = scalar_select 0, %s8, %s6
  $region1: #{tpu_custom_call.1} parent=0
    #allocation2 [shape = 'u8[262144]{0}', space=vmem, size = 0x40000, scoped, tag = 'input window, operand 0, single buffered']
    #allocation3 [shape = 's32[1]{0}', space=sflag, size = 0x4, scoped, tag = 'scoped memory for tpu_custom_call.1']
    #allocation4 [shape = 's32[1]{0}', space=sflag, size = 0x4, scoped, tag = 'scoped memory for tpu_custom_call.1']
    #allocation5 [shape = 'u8[65536]{0}', space=vmem, size = 0x10000, scoped, tag = 'input window, operand 1, single buffered']
    #allocation6 [shape = 's32[1]{0}', space=sflag, size = 0x4, scoped, tag = 'scoped memory for tpu_custom_call.1']
    #allocation7 [shape = 'u8[32768]{0}', space=vmem, size = 0x8000, scoped, tag = 'input window, operand 3, single buffered']
    #allocation8 [shape = 'u8[131072]{0}', space=vmem, size = 0x20000, scoped, tag = 'output window, operand 0, single buffered']
    %10 = vsyncpa [#allocation3], 0
    %11 = vsyncpa [#allocation6], 0
    %12 = vsyncpa [#allocation4], 0
    // Predicated region
    $region2: #{tpu_custom_call.1} parent=1 // pred_check
      _
    $region3: #{tpu_custom_call.1} parent=1 // pred_check_branch
      %14 = sbr.rel (0) target = $region5
    $region4: #{tpu_custom_call.1} parent=1 // pred_region
      %s16 = ssub.s32 8192, 8192
      %17 = vsyncadd [#allocation3], %s16
      %s18 = sshll.u32 [#allocation2], 4
      %s19 = int_to_ptr.vmem [resolvable:$true] %s18
      %24 = dma.hbm_to_vmem [thread:$0]  %s0, 8192, %s19, [#allocation3], 256, 256, 16
    $region5: #{tpu_custom_call.1} parent=1 // pred_fallthru
      _
    // Predicated region
    $region6: #{tpu_custom_call.1} parent=1 // pred_check
      _
    $region7: #{tpu_custom_call.1} parent=1 // pred_check_branch
      %26 = sbr.rel (0) target = $region9
    $region8: #{tpu_custom_call.1} parent=1 // pred_region
      %s28 = ssub.s32 2048, 2048
      %29 = vsyncadd [#allocation6], %s28
      %s30 = sshll.u32 [#allocation5], 4
      %s31 = int_to_ptr.vmem [resolvable:$true] %s30
      %36 = dma.hbm_to_vmem [thread:$0]  %s1, 2048, %s31, [#allocation6], 64, 64, 4
    $region9: #{tpu_custom_call.1} parent=1 // pred_fallthru
      _
    // Predicated region
    $region10: #{tpu_custom_call.1} parent=1 // pred_check
      _
    $region11: #{tpu_custom_call.1} parent=1 // pred_check_branch
      %38 = sbr.rel (0) target = $region13
    $region12: #{tpu_custom_call.1} parent=1 // pred_region
      _
    $region13: #{tpu_custom_call.1} parent=1 // pred_fallthru
      _
    // Predicated region
    $region14: #{tpu_custom_call.1} parent=1 // pred_check
      _
    $region15: #{tpu_custom_call.1} parent=1 // pred_check_branch
      %40 = sbr.rel (0) target = $region17
    $region16: #{tpu_custom_call.1} parent=1 // pred_region
      %s42 = ssub.s32 1024, 1024
      %43 = vsyncadd [#allocation6], %s42
      %s44 = sshll.u32 [#allocation7], 4
      %s45 = int_to_ptr.vmem [resolvable:$true] %s44
      %50 = dma.hbm_to_vmem [thread:$0]  %s3, 1024, %s45, [#allocation6], 64, 64, 4
    $region17: #{tpu_custom_call.1} parent=1 // pred_fallthru
      _
    // Predicated region
    $region18: #{tpu_custom_call.1} parent=1 // pred_check
      _
    $region19: #{tpu_custom_call.1} parent=1 // pred_check_branch
      %52 = sbr.rel (0) target = $region21
    $region20: #{tpu_custom_call.1} parent=1 // pred_region
      _
    $region21: #{tpu_custom_call.1} parent=1 // pred_fallthru
      _
    // Predicated region
    $region22: #{tpu_custom_call.1} parent=1 // pred_check
      _
    $region23: #{tpu_custom_call.1} parent=1 // pred_check_branch
      %54 = sbr.rel (0) target = $region25
    $region24: #{tpu_custom_call.1} parent=1 // pred_region
      %55 = dma.done [#allocation3], 8192
    $region25: #{tpu_custom_call.1} parent=1 // pred_fallthru
      _
    // Predicated region
    $region26: #{tpu_custom_call.1} parent=1 // pred_check
      _
    $region27: #{tpu_custom_call.1} parent=1 // pred_check_branch
      %57 = sbr.rel (0) target = $region29
    $region28: #{tpu_custom_call.1} parent=1 // pred_region
      %58 = dma.done [#allocation6], 2048
    $region29: #{tpu_custom_call.1} parent=1 // pred_fallthru
      _
    // Predicated region
    $region30: #{tpu_custom_call.1} parent=1 // pred_check
      _
    $region31: #{tpu_custom_call.1} parent=1 // pred_check_branch
      %60 = sbr.rel (0) target = $region33
    $region32: #{tpu_custom_call.1} parent=1 // pred_region
      %61 = dma.done [#allocation6], 1024
    $region33: #{tpu_custom_call.1} parent=1 // pred_fallthru
      _
    %v63 = vld [vmem:[#allocation2] sm:$0xff]
    %v64 = vld [vmem:[#allocation2 + $0x8] sm:$0xff]
    %v65 = vld [vmem:[#allocation2 + $0x10] sm:$0xff]
    %v66 = vld [vmem:[#allocation2 + $0x18] sm:$0xff]
    %v67 = vld [vmem:[#allocation2 + $0x20] sm:$0xff]
    %v68 = vld [vmem:[#allocation2 + $0x28] sm:$0xff]
    %v69 = vld [vmem:[#allocation2 + $0x30] sm:$0xff]
    %v70 = vld [vmem:[#allocation2 + $0x38] sm:$0xff]
    %v71 = vld [vmem:[#allocation2 + $0x40] sm:$0xff]
    %v72 = vld [vmem:[#allocation2 + $0x48] sm:$0xff]
    %v73 = vld [vmem:[#allocation2 + $0x50] sm:$0xff]
    %v74 = vld [vmem:[#allocation2 + $0x58] sm:$0xff]
    %v75 = vld [vmem:[#allocation2 + $0x60] sm:$0xff]
    %v76 = vld [vmem:[#allocation2 + $0x68] sm:$0xff]
    %v77 = vld [vmem:[#allocation2 + $0x70] sm:$0xff]
    %v78 = vld [vmem:[#allocation2 + $0x78] sm:$0xff]
    %v79 = vld [vmem:[#allocation2 + $0x80] sm:$0xff]
    %v80 = vld [vmem:[#allocation2 + $0x88] sm:$0xff]
    %v81 = vld [vmem:[#allocation2 + $0x90] sm:$0xff]
    %v82 = vld [vmem:[#allocation2 + $0x98] sm:$0xff]
    %v83 = vld [vmem:[#allocation2 + $0xa0] sm:$0xff]
    %v84 = vld [vmem:[#allocation2 + $0xa8] sm:$0xff]
    %v85 = vld [vmem:[#allocation2 + $0xb0] sm:$0xff]
    %v86 = vld [vmem:[#allocation2 + $0xb8] sm:$0xff]
    %v87 = vld [vmem:[#allocation2 + $0xc0] sm:$0xff]
    %v88 = vld [vmem:[#allocation2 + $0xc8] sm:$0xff]
    %v89 = vld [vmem:[#allocation2 + $0xd0] sm:$0xff]
    %v90 = vld [vmem:[#allocation2 + $0xd8] sm:$0xff]
    %v91 = vld [vmem:[#allocation2 + $0xe0] sm:$0xff]
    %v92 = vld [vmem:[#allocation2 + $0xe8] sm:$0xff]
    %v93 = vld [vmem:[#allocation2 + $0xf0] sm:$0xff]
    %v94 = vld [vmem:[#allocation2 + $0xf8] sm:$0xff]
    %v95 = vld [vmem:[#allocation2 + $0x100] sm:$0xff]
    %v96 = vld [vmem:[#allocation2 + $0x108] sm:$0xff]
    %v97 = vld [vmem:[#allocation2 + $0x110] sm:$0xff]
    %v98 = vld [vmem:[#allocation2 + $0x118] sm:$0xff]
    %v99 = vld [vmem:[#allocation2 + $0x120] sm:$0xff]
    %v100 = vld [vmem:[#allocation2 + $0x128] sm:$0xff]
    %v101 = vld [vmem:[#allocation2 + $0x130] sm:$0xff]
    %v102 = vld [vmem:[#allocation2 + $0x138] sm:$0xff]
    %v103 = vld [vmem:[#allocation2 + $0x140] sm:$0xff]
    %v104 = vld [vmem:[#allocation2 + $0x148] sm:$0xff]
    %v105 = vld [vmem:[#allocation2 + $0x150] sm:$0xff]
    %v106 = vld [vmem:[#allocation2 + $0x158] sm:$0xff]
    %v107 = vld [vmem:[#allocation2 + $0x160] sm:$0xff]
    %v108 = vld [vmem:[#allocation2 + $0x168] sm:$0xff]
    %v109 = vld [vmem:[#allocation2 + $0x170] sm:$0xff]
    %v110 = vld [vmem:[#allocation2 + $0x178] sm:$0xff]
    %v111 = vld [vmem:[#allocation2 + $0x180] sm:$0xff]
    %v112 = vld [vmem:[#allocation2 + $0x188] sm:$0xff]
    %v113 = vld [vmem:[#allocation2 + $0x190] sm:$0xff]
    %v114 = vld [vmem:[#allocation2 + $0x198] sm:$0xff]
    %v115 = vld [vmem:[#allocation2 + $0x1a0] sm:$0xff]
    %v116 = vld [vmem:[#allocation2 + $0x1a8] sm:$0xff]
    %v117 = vld [vmem:[#allocation2 + $0x1b0] sm:$0xff]
    %v118 = vld [vmem:[#allocation2 + $0x1b8] sm:$0xff]
    %v119 = vld [vmem:[#allocation2 + $0x1c0] sm:$0xff]
    %v120 = vld [vmem:[#allocation2 + $0x1c8] sm:$0xff]
    %v121 = vld [vmem:[#allocation2 + $0x1d0] sm:$0xff]
    %v122 = vld [vmem:[#allocation2 + $0x1d8] sm:$0xff]
    %v123 = vld [vmem:[#allocation2 + $0x1e0] sm:$0xff]
    %v124 = vld [vmem:[#allocation2 + $0x1e8] sm:$0xff]
    %v125 = vld [vmem:[#allocation2 + $0x1f0] sm:$0xff]
    %v126 = vld [vmem:[#allocation2 + $0x1f8] sm:$0xff]
    %v127 = vpack.c.bf16 %v65, %v63
    %v128 = vpack.c.bf16 %v66, %v64
    %v129 = vpack.c.bf16 %v69, %v67
    %v130 = vpack.c.bf16 %v70, %v68
    %v131 = vpack.c.bf16 %v73, %v71
    %v132 = vpack.c.bf16 %v74, %v72
    %v133 = vpack.c.bf16 %v77, %v75
    %v134 = vpack.c.bf16 %v78, %v76
    %v135 = vpack.c.bf16 %v81, %v79
    %v136 = vpack.c.bf16 %v82, %v80
    %v137 = vpack.c.bf16 %v85, %v83
    %v138 = vpack.c.bf16 %v86, %v84
    %v139 = vpack.c.bf16 %v89, %v87
    %v140 = vpack.c.bf16 %v90, %v88
    %v141 = vpack.c.bf16 %v93, %v91
    %v142 = vpack.c.bf16 %v94, %v92
    %v143 = vpack.c.bf16 %v97, %v95
    %v144 = vpack.c.bf16 %v98, %v96
    %v145 = vpack.c.bf16 %v101, %v99
    %v146 = vpack.c.bf16 %v102, %v100
    %v147 = vpack.c.bf16 %v105, %v103
    %v148 = vpack.c.bf16 %v106, %v104
    %v149 = vpack.c.bf16 %v109, %v107
    %v150 = vpack.c.bf16 %v110, %v108
    %v151 = vpack.c.bf16 %v113, %v111
    %v152 = vpack.c.bf16 %v114, %v112
    %v153 = vpack.c.bf16 %v117, %v115
    %v154 = vpack.c.bf16 %v118, %v116
    %v155 = vpack.c.bf16 %v121, %v119
    %v156 = vpack.c.bf16 %v122, %v120
    %v157 = vpack.c.bf16 %v125, %v123
    %v158 = vpack.c.bf16 %v126, %v124
    %v159 = vld [vmem:[#allocation5] sm:$0xf]
    %v160 = vld [vmem:[#allocation5 + $0x4] sm:$0xf]
    %v161 = vld [vmem:[#allocation5 + $0x8] sm:$0xf]
    %v162 = vld [vmem:[#allocation5 + $0xc] sm:$0xf]
    %v163 = vld [vmem:[#allocation5 + $0x10] sm:$0xf]
    %v164 = vld [vmem:[#allocation5 + $0x14] sm:$0xf]
    %v165 = vld [vmem:[#allocation5 + $0x18] sm:$0xf]
    %v166 = vld [vmem:[#allocation5 + $0x1c] sm:$0xf]
    %v167 = vld [vmem:[#allocation5 + $0x20] sm:$0xf]
    %v168 = vld [vmem:[#allocation5 + $0x24] sm:$0xf]
    %v169 = vld [vmem:[#allocation5 + $0x28] sm:$0xf]
    %v170 = vld [vmem:[#allocation5 + $0x2c] sm:$0xf]
    %v171 = vld [vmem:[#allocation5 + $0x30] sm:$0xf]
    %v172 = vld [vmem:[#allocation5 + $0x34] sm:$0xf]
    %v173 = vld [vmem:[#allocation5 + $0x38] sm:$0xf]
    %v174 = vld [vmem:[#allocation5 + $0x3c] sm:$0xf]
    %v175 = vld [vmem:[#allocation5 + $0x40] sm:$0xf]
    %v176 = vld [vmem:[#allocation5 + $0x44] sm:$0xf]
    %v177 = vld [vmem:[#allocation5 + $0x48] sm:$0xf]
    %v178 = vld [vmem:[#allocation5 + $0x4c] sm:$0xf]
    %v179 = vld [vmem:[#allocation5 + $0x50] sm:$0xf]
    %v180 = vld [vmem:[#allocation5 + $0x54] sm:$0xf]
    %v181 = vld [vmem:[#allocation5 + $0x58] sm:$0xf]
    %v182 = vld [vmem:[#allocation5 + $0x5c] sm:$0xf]
    %v183 = vld [vmem:[#allocation5 + $0x60] sm:$0xf]
    %v184 = vld [vmem:[#allocation5 + $0x64] sm:$0xf]
    %v185 = vld [vmem:[#allocation5 + $0x68] sm:$0xf]
    %v186 = vld [vmem:[#allocation5 + $0x6c] sm:$0xf]
    %v187 = vld [vmem:[#allocation5 + $0x70] sm:$0xf]
    %v188 = vld [vmem:[#allocation5 + $0x74] sm:$0xf]
    %v189 = vld [vmem:[#allocation5 + $0x78] sm:$0xf]
    %v190 = vld [vmem:[#allocation5 + $0x7c] sm:$0xf]
    %v191 = vld [vmem:[%s2] sm:$0x1]
    %v193 = vlaneseq
    %v194 = vshrl.u32 %v193, 7
    %v195 = vsub.s32 0, %v194
    %v196 = vrot.slane %v191, %v195
    %v230 = vunpack.c.l.b16 %v159
    %v231 = vunpack.c.l.b16 %v160
    %v232 = vunpack.c.l.b16 %v161
    %v233 = vunpack.c.l.b16 %v162
    %v234 = vunpack.c.l.b16 %v163
    %v235 = vunpack.c.l.b16 %v164
    %v236 = vunpack.c.l.b16 %v165
    %v237 = vunpack.c.l.b16 %v166
    %v238 = vunpack.c.l.b16 %v167
    %v239 = vunpack.c.l.b16 %v168
    %v240 = vunpack.c.l.b16 %v169
    %v241 = vunpack.c.l.b16 %v170
    %v242 = vunpack.c.l.b16 %v171
    %v243 = vunpack.c.l.b16 %v172
    %v244 = vunpack.c.l.b16 %v173
    %v245 = vunpack.c.l.b16 %v174
    %v246 = vunpack.c.l.b16 %v175
    %v247 = vunpack.c.l.b16 %v176
    %v248 = vunpack.c.l.b16 %v177
    %v249 = vunpack.c.l.b16 %v178
    %v250 = vunpack.c.l.b16 %v179
    %v251 = vunpack.c.l.b16 %v180
    %v252 = vunpack.c.l.b16 %v181
    %v253 = vunpack.c.l.b16 %v182
    %v254 = vunpack.c.l.b16 %v183
    %v255 = vunpack.c.l.b16 %v184
    %v256 = vunpack.c.l.b16 %v185
    %v257 = vunpack.c.l.b16 %v186
    %v258 = vunpack.c.l.b16 %v187
    %v259 = vunpack.c.l.b16 %v188
    %v260 = vunpack.c.l.b16 %v189
    %v261 = vunpack.c.l.b16 %v190
    %v262 = vpack.c.b16 %v231, %v230
    %v263 = vpack.c.b16 %v233, %v232
    %v264 = vpack.c.b16 %v235, %v234
    %v265 = vpack.c.b16 %v237, %v236
    %v266 = vpack.c.b16 %v239, %v238
    %v267 = vpack.c.b16 %v241, %v240
    %v268 = vpack.c.b16 %v243, %v242
    %v269 = vpack.c.b16 %v245, %v244
    %v270 = vpack.c.b16 %v247, %v246
    %v271 = vpack.c.b16 %v249, %v248
    %v272 = vpack.c.b16 %v251, %v250
    %v273 = vpack.c.b16 %v253, %v252
    %v274 = vpack.c.b16 %v255, %v254
    %v275 = vpack.c.b16 %v257, %v256
    %v276 = vpack.c.b16 %v259, %v258
    %v277 = vpack.c.b16 %v261, %v260
    %294 = vmatprep.subr.bf16.mxu0 0
    %295 = vmatpush1.bf16.msra.mxu0 %v262
    %296 = vmatprep.subr.bf16.mxu0 0
    %297 = vmatpush1.bf16.msra.mxu0 %v263
    %298 = vmatprep.subr.bf16.mxu0 0
    %299 = vmatpush1.bf16.msra.mxu0 %v264
    %300 = vmatprep.subr.bf16.mxu0 0
    %301 = vmatpush1.bf16.msra.mxu0 %v265
    %302 = vmatprep.subr.bf16.mxu0 0
    %303 = vmatpush1.bf16.msra.mxu0 %v266
    %304 = vmatprep.subr.bf16.mxu0 0
    %305 = vmatpush1.bf16.msra.mxu0 %v267
    %306 = vmatprep.subr.bf16.mxu0 0
    %307 = vmatpush1.bf16.msra.mxu0 %v268
    %308 = vmatprep.subr.bf16.mxu0 0
    %309 = vmatpush1.bf16.msra.mxu0 %v269
    %310 = vmatprep.subr.bf16.mxu0 0
    %311 = vmatpush1.bf16.msra.mxu0 %v270
    %312 = vmatprep.subr.bf16.mxu0 0
    %313 = vmatpush1.bf16.msra.mxu0 %v271
    %314 = vmatprep.subr.bf16.mxu0 0
    %315 = vmatpush1.bf16.msra.mxu0 %v272
    %316 = vmatprep.subr.bf16.mxu0 0
    %317 = vmatpush1.bf16.msra.mxu0 %v273
    %318 = vmatprep.subr.bf16.mxu0 0
    %319 = vmatpush1.bf16.msra.mxu0 %v274
    %320 = vmatprep.subr.bf16.mxu0 0
    %321 = vmatpush1.bf16.msra.mxu0 %v275
    %322 = vmatprep.subr.bf16.mxu0 0
    %323 = vmatpush1.bf16.msra.mxu0 %v276
    %324 = vmatprep.subr.bf16.mxu0 0
    %325 = vmatpush1.bf16.msra.mxu0 %v277
    %326 = vmatprep.mubr.bf16.mxu0 %v128
    %327 = vmatmul.mubr.bf16.gmra.mrb[0].mxu0 %v127
    %v328 = vpop.f32.mrb[0].mxu0
    %v329 = vadd.f32 %v196, %v328
    %v330 = vpop.f32.mrb[0].mxu0
    %v331 = vpop.f32.mrb[0].mxu0
    %v332 = vadd.f32 %v196, %v331
    %v333 = vpop.f32.mrb[0].mxu0
    %334 = vmatprep.mubr.bf16.mxu0 %v130
    %335 = vmatmul.mubr.bf16.gmra.mrb[0].mxu0 %v129
    %v336 = vpop.f32.mrb[0].mxu0
    %v337 = vadd.f32 %v196, %v336
    %v338 = vpop.f32.mrb[0].mxu0
    %v339 = vpop.f32.mrb[0].mxu0
    %v340 = vadd.f32 %v196, %v339
    %v341 = vpop.f32.mrb[0].mxu0
    %342 = vmatprep.mubr.bf16.mxu0 %v132
    %343 = vmatmul.mubr.bf16.gmra.mrb[0].mxu0 %v131
    %v344 = vpop.f32.mrb[0].mxu0
    %v345 = vadd.f32 %v196, %v344
    %v346 = vpop.f32.mrb[0].mxu0
    %v347 = vpop.f32.mrb[0].mxu0
    %v348 = vadd.f32 %v196, %v347
    %v349 = vpop.f32.mrb[0].mxu0
    %350 = vmatprep.mubr.bf16.mxu0 %v134
    %351 = vmatmul.mubr.bf16.gmra.mrb[0].mxu0 %v133
    %v352 = vpop.f32.mrb[0].mxu0
    %v353 = vadd.f32 %v196, %v352
    %v354 = vpop.f32.mrb[0].mxu0
    %v355 = vpop.f32.mrb[0].mxu0
    %v356 = vadd.f32 %v196, %v355
    %v357 = vpop.f32.mrb[0].mxu0
    %358 = vmatprep.mubr.bf16.mxu0 %v136
    %359 = vmatmul.mubr.bf16.gmra.mrb[0].mxu0 %v135
    %v360 = vpop.f32.mrb[0].mxu0
    %v361 = vadd.f32 %v196, %v360
    %v362 = vpop.f32.mrb[0].mxu0
    %v363 = vpop.f32.mrb[0].mxu0
    %v364 = vadd.f32 %v196, %v363
    %v365 = vpop.f32.mrb[0].mxu0
    %366 = vmatprep.mubr.bf16.mxu0 %v138
    %367 = vmatmul.mubr.bf16.gmra.mrb[0].mxu0 %v137
    %v368 = vpop.f32.mrb[0].mxu0
    %v369 = vadd.f32 %v196, %v368
    %v370 = vpop.f32.mrb[0].mxu0
    %v371 = vpop.f32.mrb[0].mxu0
    %v372 = vadd.f32 %v196, %v371
    %v373 = vpop.f32.mrb[0].mxu0
    %374 = vmatprep.mubr.bf16.mxu0 %v140
    %375 = vmatmul.mubr.bf16.gmra.mrb[0].mxu0 %v139
    %v376 = vpop.f32.mrb[0].mxu0
    %v377 = vadd.f32 %v196, %v376
    %v378 = vpop.f32.mrb[0].mxu0
    %v379 = vpop.f32.mrb[0].mxu0
    %v380 = vadd.f32 %v196, %v379
    %v381 = vpop.f32.mrb[0].mxu0
    %382 = vmatprep.mubr.bf16.mxu0 %v142
    %383 = vmatmul.mubr.bf16.gmra.mrb[0].mxu0 %v141
    %v384 = vpop.f32.mrb[0].mxu0
    %v385 = vadd.f32 %v196, %v384
    %v386 = vpop.f32.mrb[0].mxu0
    %v387 = vpop.f32.mrb[0].mxu0
    %v388 = vadd.f32 %v196, %v387
    %v389 = vpop.f32.mrb[0].mxu0
    %390 = vmatprep.mubr.bf16.mxu0 %v144
    %391 = vmatmul.mubr.bf16.gmra.mrb[0].mxu0 %v143
    %v392 = vpop.f32.mrb[0].mxu0
    %v393 = vadd.f32 %v196, %v392
    %v394 = vpop.f32.mrb[0].mxu0
    %v395 = vpop.f32.mrb[0].mxu0
    %v396 = vadd.f32 %v196, %v395
    %v397 = vpop.f32.mrb[0].mxu0
    %398 = vmatprep.mubr.bf16.mxu0 %v146
    %399 = vmatmul.mubr.bf16.gmra.mrb[0].mxu0 %v145
    %v400 = vpop.f32.mrb[0].mxu0
    %v401 = vadd.f32 %v196, %v400
    %v402 = vpop.f32.mrb[0].mxu0
    %v403 = vpop.f32.mrb[0].mxu0
    %v404 = vadd.f32 %v196, %v403
    %v405 = vpop.f32.mrb[0].mxu0
    %406 = vmatprep.mubr.bf16.mxu0 %v148
    %407 = vmatmul.mubr.bf16.gmra.mrb[0].mxu0 %v147
    %v408 = vpop.f32.mrb[0].mxu0
    %v409 = vadd.f32 %v196, %v408
    %v410 = vpop.f32.mrb[0].mxu0
    %v411 = vpop.f32.mrb[0].mxu0
    %v412 = vadd.f32 %v196, %v411
    %v413 = vpop.f32.mrb[0].mxu0
    %414 = vmatprep.mubr.bf16.mxu0 %v150
    %415 = vmatmul.mubr.bf16.gmra.mrb[0].mxu0 %v149
    %v416 = vpop.f32.mrb[0].mxu0
    %v417 = vadd.f32 %v196, %v416
    %v418 = vpop.f32.mrb[0].mxu0
    %v419 = vpop.f32.mrb[0].mxu0
    %v420 = vadd.f32 %v196, %v419
    %v421 = vpop.f32.mrb[0].mxu0
    %422 = vmatprep.mubr.bf16.mxu0 %v152
    %423 = vmatmul.mubr.bf16.gmra.mrb[0].mxu0 %v151
    %v424 = vpop.f32.mrb[0].mxu0
    %v425 = vadd.f32 %v196, %v424
    %v426 = vpop.f32.mrb[0].mxu0
    %v427 = vpop.f32.mrb[0].mxu0
    %v428 = vadd.f32 %v196, %v427
    %v429 = vpop.f32.mrb[0].mxu0
    %430 = vmatprep.mubr.bf16.mxu0 %v154
    %431 = vmatmul.mubr.bf16.gmra.mrb[0].mxu0 %v153
    %v432 = vpop.f32.mrb[0].mxu0
    %v433 = vadd.f32 %v196, %v432
    %v434 = vpop.f32.mrb[0].mxu0
    %v435 = vpop.f32.mrb[0].mxu0
    %v436 = vadd.f32 %v196, %v435
    %v437 = vpop.f32.mrb[0].mxu0
    %438 = vmatprep.mubr.bf16.mxu0 %v156
    %439 = vmatmul.mubr.bf16.gmra.mrb[0].mxu0 %v155
    %v440 = vpop.f32.mrb[0].mxu0
    %v441 = vadd.f32 %v196, %v440
    %v442 = vpop.f32.mrb[0].mxu0
    %v443 = vpop.f32.mrb[0].mxu0
    %v444 = vadd.f32 %v196, %v443
    %v445 = vpop.f32.mrb[0].mxu0
    %446 = vmatprep.mubr.bf16.mxu0 %v158
    %447 = vmatmul.mubr.bf16.gmra.mrb[0].mxu0 %v157
    %v448 = vpop.f32.mrb[0].mxu0
    %v449 = vadd.f32 %v196, %v448
    %v450 = vpop.f32.mrb[0].mxu0
    %v451 = vpop.f32.mrb[0].mxu0
    %v452 = vadd.f32 %v196, %v451
    %v453 = vpop.f32.mrb[0].mxu0
    %454 = vdwg.mxu0
    %v455 = vmax.f32 %v329, 0.0
    %v456 = vmax.f32 %v332, 0.0
    %v457 = vmax.f32 %v337, 0.0
    %v458 = vmax.f32 %v340, 0.0
    %v459 = vmax.f32 %v345, 0.0
    %v460 = vmax.f32 %v348, 0.0
    %v461 = vmax.f32 %v353, 0.0
    %v462 = vmax.f32 %v356, 0.0
    %v463 = vmax.f32 %v361, 0.0
    %v464 = vmax.f32 %v364, 0.0
    %v465 = vmax.f32 %v369, 0.0
    %v466 = vmax.f32 %v372, 0.0
    %v467 = vmax.f32 %v377, 0.0
    %v468 = vmax.f32 %v380, 0.0
    %v469 = vmax.f32 %v385, 0.0
    %v470 = vmax.f32 %v388, 0.0
    %v471 = vmax.f32 %v393, 0.0
    %v472 = vmax.f32 %v396, 0.0
    %v473 = vmax.f32 %v401, 0.0
    %v474 = vmax.f32 %v404, 0.0
    %v475 = vmax.f32 %v409, 0.0
    %v476 = vmax.f32 %v412, 0.0
    %v477 = vmax.f32 %v417, 0.0
    %v478 = vmax.f32 %v420, 0.0
    %v479 = vmax.f32 %v425, 0.0
    %v480 = vmax.f32 %v428, 0.0
    %v481 = vmax.f32 %v433, 0.0
    %v482 = vmax.f32 %v436, 0.0
    %v483 = vmax.f32 %v441, 0.0
    %v484 = vmax.f32 %v444, 0.0
    %v485 = vmax.f32 %v449, 0.0
    %v486 = vmax.f32 %v452, 0.0
    %v487 = vpack.c.bf16 %v456, %v455
    %v488 = vpack.c.bf16 %v458, %v457
    %v489 = vpack.c.bf16 %v460, %v459
    %v490 = vpack.c.bf16 %v462, %v461
    %v491 = vpack.c.bf16 %v464, %v463
    %v492 = vpack.c.bf16 %v466, %v465
    %v493 = vpack.c.bf16 %v468, %v467
    %v494 = vpack.c.bf16 %v470, %v469
    %v495 = vpack.c.bf16 %v472, %v471
    %v496 = vpack.c.bf16 %v474, %v473
    %v497 = vpack.c.bf16 %v476, %v475
    %v498 = vpack.c.bf16 %v478, %v477
    %v499 = vpack.c.bf16 %v480, %v479
    %v500 = vpack.c.bf16 %v482, %v481
    %v501 = vpack.c.bf16 %v484, %v483
    %v502 = vpack.c.bf16 %v486, %v485
    %v503 = vld [vmem:[#allocation7] sm:$0xf]
    %v504 = vld [vmem:[#allocation7 + $0x4] sm:$0xf]
    %v505 = vld [vmem:[#allocation7 + $0x8] sm:$0xf]
    %v506 = vld [vmem:[#allocation7 + $0xc] sm:$0xf]
    %v507 = vld [vmem:[#allocation7 + $0x10] sm:$0xf]
    %v508 = vld [vmem:[#allocation7 + $0x14] sm:$0xf]
    %v509 = vld [vmem:[#allocation7 + $0x18] sm:$0xf]
    %v510 = vld [vmem:[#allocation7 + $0x1c] sm:$0xf]
    %v511 = vld [vmem:[#allocation7 + $0x20] sm:$0xf]
    %v512 = vld [vmem:[#allocation7 + $0x24] sm:$0xf]
    %v513 = vld [vmem:[#allocation7 + $0x28] sm:$0xf]
    %v514 = vld [vmem:[#allocation7 + $0x2c] sm:$0xf]
    %v515 = vld [vmem:[#allocation7 + $0x30] sm:$0xf]
    %v516 = vld [vmem:[#allocation7 + $0x34] sm:$0xf]
    %v517 = vld [vmem:[#allocation7 + $0x38] sm:$0xf]
    %v518 = vld [vmem:[#allocation7 + $0x3c] sm:$0xf]
    %v519 = vld [vmem:[%s4] sm:$0x1]
    %v521 = vlaneseq
    %v522 = vshrl.u32 %v521, 7
    %v523 = vsub.s32 0, %v522
    %v524 = vrot.slane %v519, %v523
    %v542 = vunpack.c.l.b16 %v503
    %v543 = vunpack.c.l.b16 %v504
    %v544 = vunpack.c.l.b16 %v505
    %v545 = vunpack.c.l.b16 %v506
    %v546 = vunpack.c.l.b16 %v507
    %v547 = vunpack.c.l.b16 %v508
    %v548 = vunpack.c.l.b16 %v509
    %v549 = vunpack.c.l.b16 %v510
    %v550 = vunpack.c.l.b16 %v511
    %v551 = vunpack.c.l.b16 %v512
    %v552 = vunpack.c.l.b16 %v513
    %v553 = vunpack.c.l.b16 %v514
    %v554 = vunpack.c.l.b16 %v515
    %v555 = vunpack.c.l.b16 %v516
    %v556 = vunpack.c.l.b16 %v517
    %v557 = vunpack.c.l.b16 %v518
    %v558 = vpack.c.b16 %v543, %v542
    %v559 = vpack.c.b16 %v545, %v544
    %v560 = vpack.c.b16 %v547, %v546
    %v561 = vpack.c.b16 %v549, %v548
    %v562 = vpack.c.b16 %v551, %v550
    %v563 = vpack.c.b16 %v553, %v552
    %v564 = vpack.c.b16 %v555, %v554
    %v565 = vpack.c.b16 %v557, %v556
    %574 = vmatprep.subr.bf16.mxu0 0
    %575 = vmatpush1.bf16.msra.mxu0 %v558
    %576 = vmatprep.subr.bf16.mxu0 0
    %577 = vmatpush1.bf16.msra.mxu0 %v559
    %578 = vmatprep.subr.bf16.mxu0 0
    %579 = vmatpush1.bf16.msra.mxu0 %v560
    %580 = vmatprep.subr.bf16.mxu0 0
    %581 = vmatpush1.bf16.msra.mxu0 %v561
    %582 = vmatprep.subr.bf16.mxu0 0
    %583 = vmatpush1.bf16.msra.mxu0 %v562
    %584 = vmatprep.subr.bf16.mxu0 0
    %585 = vmatpush1.bf16.msra.mxu0 %v563
    %586 = vmatprep.subr.bf16.mxu0 0
    %587 = vmatpush1.bf16.msra.mxu0 %v564
    %588 = vmatprep.subr.bf16.mxu0 0
    %589 = vmatpush1.bf16.msra.mxu0 %v565
    %590 = vmatprep.subr.bf16.mxu0 0
    %591 = vmatpush1.bf16.msra.mxu0 0
    %592 = vmatprep.subr.bf16.mxu0 0
    %593 = vmatpush1.bf16.msra.mxu0 0
    %594 = vmatprep.subr.bf16.mxu0 0
    %595 = vmatpush1.bf16.msra.mxu0 0
    %596 = vmatprep.subr.bf16.mxu0 0
    %597 = vmatpush1.bf16.msra.mxu0 0
    %598 = vmatprep.subr.bf16.mxu0 0
    %599 = vmatpush1.bf16.msra.mxu0 0
    %600 = vmatprep.subr.bf16.mxu0 0
    %601 = vmatpush1.bf16.msra.mxu0 0
    %602 = vmatprep.subr.bf16.mxu0 0
    %603 = vmatpush1.bf16.msra.mxu0 0
    %604 = vmatprep.subr.bf16.mxu0 0
    %605 = vmatpush1.bf16.msra.mxu0 0
    %606 = vmatprep.mubr.bf16.mxu0 0
    %607 = vmatmul.mubr.bf16.gmra.mrb[0].mxu0 %v487
    %v608 = vpop.f32.mrb[0].mxu0
    %v609 = vadd.f32 %v524, %v608
    %v610 = vpop.f32.mrb[0].mxu0
    %v611 = vpop.f32.mrb[0].mxu0
    %v612 = vadd.f32 %v524, %v611
    %v613 = vpop.f32.mrb[0].mxu0
    %614 = vmatprep.mubr.bf16.mxu0 0
    %615 = vmatmul.mubr.bf16.gmra.mrb[0].mxu0 %v488
    %v616 = vpop.f32.mrb[0].mxu0
    %v617 = vadd.f32 %v524, %v616
    %v618 = vpop.f32.mrb[0].mxu0
    %v619 = vpop.f32.mrb[0].mxu0
    %v620 = vadd.f32 %v524, %v619
    %v621 = vpop.f32.mrb[0].mxu0
    %622 = vmatprep.mubr.bf16.mxu0 0
    %623 = vmatmul.mubr.bf16.gmra.mrb[0].mxu0 %v489
    %v624 = vpop.f32.mrb[0].mxu0
    %v625 = vadd.f32 %v524, %v624
    %v626 = vpop.f32.mrb[0].mxu0
    %v627 = vpop.f32.mrb[0].mxu0
    %v628 = vadd.f32 %v524, %v627
    %v629 = vpop.f32.mrb[0].mxu0
    %630 = vmatprep.mubr.bf16.mxu0 0
    %631 = vmatmul.mubr.bf16.gmra.mrb[0].mxu0 %v490
    %v632 = vpop.f32.mrb[0].mxu0
    %v633 = vadd.f32 %v524, %v632
    %v634 = vpop.f32.mrb[0].mxu0
    %v635 = vpop.f32.mrb[0].mxu0
    %v636 = vadd.f32 %v524, %v635
    %v637 = vpop.f32.mrb[0].mxu0
    %638 = vmatprep.mubr.bf16.mxu0 0
    %639 = vmatmul.mubr.bf16.gmra.mrb[0].mxu0 %v491
    %v640 = vpop.f32.mrb[0].mxu0
    %v641 = vadd.f32 %v524, %v640
    %v642 = vpop.f32.mrb[0].mxu0
    %v643 = vpop.f32.mrb[0].mxu0
    %v644 = vadd.f32 %v524, %v643
    %v645 = vpop.f32.mrb[0].mxu0
    %646 = vmatprep.mubr.bf16.mxu0 0
    %647 = vmatmul.mubr.bf16.gmra.mrb[0].mxu0 %v492
    %v648 = vpop.f32.mrb[0].mxu0
    %v649 = vadd.f32 %v524, %v648
    %v650 = vpop.f32.mrb[0].mxu0
    %v651 = vpop.f32.mrb[0].mxu0
    %v652 = vadd.f32 %v524, %v651
    %v653 = vpop.f32.mrb[0].mxu0
    %654 = vmatprep.mubr.bf16.mxu0 0
    %655 = vmatmul.mubr.bf16.gmra.mrb[0].mxu0 %v493
    %v656 = vpop.f32.mrb[0].mxu0
    %v657 = vadd.f32 %v524, %v656
    %v658 = vpop.f32.mrb[0].mxu0
    %v659 = vpop.f32.mrb[0].mxu0
    %v660 = vadd.f32 %v524, %v659
    %v661 = vpop.f32.mrb[0].mxu0
    %662 = vmatprep.mubr.bf16.mxu0 0
    %663 = vmatmul.mubr.bf16.gmra.mrb[0].mxu0 %v494
    %v664 = vpop.f32.mrb[0].mxu0
    %v665 = vadd.f32 %v524, %v664
    %v666 = vpop.f32.mrb[0].mxu0
    %v667 = vpop.f32.mrb[0].mxu0
    %v668 = vadd.f32 %v524, %v667
    %v669 = vpop.f32.mrb[0].mxu0
    %670 = vmatprep.mubr.bf16.mxu0 0
    %671 = vmatmul.mubr.bf16.gmra.mrb[0].mxu0 %v495
    %v672 = vpop.f32.mrb[0].mxu0
    %v673 = vadd.f32 %v524, %v672
    %v674 = vpop.f32.mrb[0].mxu0
    %v675 = vpop.f32.mrb[0].mxu0
    %v676 = vadd.f32 %v524, %v675
    %v677 = vpop.f32.mrb[0].mxu0
    %678 = vmatprep.mubr.bf16.mxu0 0
    %679 = vmatmul.mubr.bf16.gmra.mrb[0].mxu0 %v496
    %v680 = vpop.f32.mrb[0].mxu0
    %v681 = vadd.f32 %v524, %v680
    %v682 = vpop.f32.mrb[0].mxu0
    %v683 = vpop.f32.mrb[0].mxu0
    %v684 = vadd.f32 %v524, %v683
    %v685 = vpop.f32.mrb[0].mxu0
    %686 = vmatprep.mubr.bf16.mxu0 0
    %687 = vmatmul.mubr.bf16.gmra.mrb[0].mxu0 %v497
    %v688 = vpop.f32.mrb[0].mxu0
    %v689 = vadd.f32 %v524, %v688
    %v690 = vpop.f32.mrb[0].mxu0
    %v691 = vpop.f32.mrb[0].mxu0
    %v692 = vadd.f32 %v524, %v691
    %v693 = vpop.f32.mrb[0].mxu0
    %694 = vmatprep.mubr.bf16.mxu0 0
    %695 = vmatmul.mubr.bf16.gmra.mrb[0].mxu0 %v498
    %v696 = vpop.f32.mrb[0].mxu0
    %v697 = vadd.f32 %v524, %v696
    %v698 = vpop.f32.mrb[0].mxu0
    %v699 = vpop.f32.mrb[0].mxu0
    %v700 = vadd.f32 %v524, %v699
    %v701 = vpop.f32.mrb[0].mxu0
    %702 = vmatprep.mubr.bf16.mxu0 0
    %703 = vmatmul.mubr.bf16.gmra.mrb[0].mxu0 %v499
    %v704 = vpop.f32.mrb[0].mxu0
    %v705 = vadd.f32 %v524, %v704
    %v706 = vpop.f32.mrb[0].mxu0
    %v707 = vpop.f32.mrb[0].mxu0
    %v708 = vadd.f32 %v524, %v707
    %v709 = vpop.f32.mrb[0].mxu0
    %710 = vmatprep.mubr.bf16.mxu0 0
    %711 = vmatmul.mubr.bf16.gmra.mrb[0].mxu0 %v500
    %v712 = vpop.f32.mrb[0].mxu0
    %v713 = vadd.f32 %v524, %v712
    %v714 = vpop.f32.mrb[0].mxu0
    %v715 = vpop.f32.mrb[0].mxu0
    %v716 = vadd.f32 %v524, %v715
    %v717 = vpop.f32.mrb[0].mxu0
    %718 = vmatprep.mubr.bf16.mxu0 0
    %719 = vmatmul.mubr.bf16.gmra.mrb[0].mxu0 %v501
    %v720 = vpop.f32.mrb[0].mxu0
    %v721 = vadd.f32 %v524, %v720
    %v722 = vpop.f32.mrb[0].mxu0
    %v723 = vpop.f32.mrb[0].mxu0
    %v724 = vadd.f32 %v524, %v723
    %v725 = vpop.f32.mrb[0].mxu0
    %726 = vmatprep.mubr.bf16.mxu0 0
    %727 = vmatmul.mubr.bf16.gmra.mrb[0].mxu0 %v502
    %v728 = vpop.f32.mrb[0].mxu0
    %v729 = vadd.f32 %v524, %v728
    %v730 = vpop.f32.mrb[0].mxu0
    %v731 = vpop.f32.mrb[0].mxu0
    %v732 = vadd.f32 %v524, %v731
    %v733 = vpop.f32.mrb[0].mxu0
    %734 = vdwg.mxu0
    %735 = vst [vmem:[#allocation8] sm:$0xff] %v609
    %736 = vst [vmem:[#allocation8 + $0x8] sm:$0xff] %v612
    %737 = vst [vmem:[#allocation8 + $0x10] sm:$0xff] %v617
    %738 = vst [vmem:[#allocation8 + $0x18] sm:$0xff] %v620
    %739 = vst [vmem:[#allocation8 + $0x20] sm:$0xff] %v625
    %740 = vst [vmem:[#allocation8 + $0x28] sm:$0xff] %v628
    %741 = vst [vmem:[#allocation8 + $0x30] sm:$0xff] %v633
    %742 = vst [vmem:[#allocation8 + $0x38] sm:$0xff] %v636
    %743 = vst [vmem:[#allocation8 + $0x40] sm:$0xff] %v641
    %744 = vst [vmem:[#allocation8 + $0x48] sm:$0xff] %v644
    %745 = vst [vmem:[#allocation8 + $0x50] sm:$0xff] %v649
    %746 = vst [vmem:[#allocation8 + $0x58] sm:$0xff] %v652
    %747 = vst [vmem:[#allocation8 + $0x60] sm:$0xff] %v657
    %748 = vst [vmem:[#allocation8 + $0x68] sm:$0xff] %v660
    %749 = vst [vmem:[#allocation8 + $0x70] sm:$0xff] %v665
    %750 = vst [vmem:[#allocation8 + $0x78] sm:$0xff] %v668
    %751 = vst [vmem:[#allocation8 + $0x80] sm:$0xff] %v673
    %752 = vst [vmem:[#allocation8 + $0x88] sm:$0xff] %v676
    %753 = vst [vmem:[#allocation8 + $0x90] sm:$0xff] %v681
    %754 = vst [vmem:[#allocation8 + $0x98] sm:$0xff] %v684
    %755 = vst [vmem:[#allocation8 + $0xa0] sm:$0xff] %v689
    %756 = vst [vmem:[#allocation8 + $0xa8] sm:$0xff] %v692
    %757 = vst [vmem:[#allocation8 + $0xb0] sm:$0xff] %v697
    %758 = vst [vmem:[#allocation8 + $0xb8] sm:$0xff] %v700
    %759 = vst [vmem:[#allocation8 + $0xc0] sm:$0xff] %v705
    %760 = vst [vmem:[#allocation8 + $0xc8] sm:$0xff] %v708
    %761 = vst [vmem:[#allocation8 + $0xd0] sm:$0xff] %v713
    %762 = vst [vmem:[#allocation8 + $0xd8] sm:$0xff] %v716
    %763 = vst [vmem:[#allocation8 + $0xe0] sm:$0xff] %v721
    %764 = vst [vmem:[#allocation8 + $0xe8] sm:$0xff] %v724
    %765 = vst [vmem:[#allocation8 + $0xf0] sm:$0xff] %v729
    %766 = vst [vmem:[#allocation8 + $0xf8] sm:$0xff] %v732
    // Predicated region
    $region34: #{tpu_custom_call.1} parent=1 // pred_check
      _
    $region35: #{tpu_custom_call.1} parent=1 // pred_check_branch
      %768 = sbr.rel (0) target = $region37
    $region36: #{tpu_custom_call.1} parent=1 // pred_region
      %s770 = ssub.s32 4096, 4096
      %771 = vsyncadd [#allocation4], %s770
      %s772 = sshll.u32 [#allocation8], 4
      %s773 = int_to_ptr.vmem [resolvable:$true] %s772
      %778 = dma.vmem_to_hbm [thread:$0]  %s773, 4096, %s5, [#allocation4], 128, 128, 8
    $region37: #{tpu_custom_call.1} parent=1 // pred_fallthru
      _
    // Predicated region
    $region38: #{tpu_custom_call.1} parent=1 // pred_check
      _
    $region39: #{tpu_custom_call.1} parent=1 // pred_check_branch
      %780 = sbr.rel (0) target = $region41
    $region40: #{tpu_custom_call.1} parent=1 // pred_region
      %781 = dma.done [#allocation4], 4096
    $region41: #{tpu_custom_call.1} parent=1 // pred_fallthru
      _
    %782 = vsyncpa [#allocation3], 1
    %783 = vsyncpa [#allocation6], 1
    %784 = vsyncpa [#allocation4], 1

</llo_original>
